<compile_context>
chip_gen: v6e
topology: v6e:2x2x1
jax: 0.10.0
libtpu: 0.0.40
codegen_flags: <defaults>
</compile_context>

<pallas_src>
import math

import jax
import jax.numpy as jnp
from jax.experimental import pallas as pl
from jax.experimental.pallas import tpu as pltpu


def _gelu_kernel(x_ref, o_ref):
    # f32 compute; exact for f32 inputs, better accuracy + no packing churn for bf16.
    x = x_ref[...].astype(jnp.float32)
    two_c = jnp.float32(2.0 * math.sqrt(2.0 / math.pi))
    # 0.5 * x * (1 + tanh(c*(x + 0.044715*x^3)))  ==  x * sigmoid(2c*x*(1 + 0.044715*x^2))
    z = two_c * x * (jnp.float32(1.0) + jnp.float32(0.044715) * (x * x))
    y = x * jax.nn.sigmoid(z)
    o_ref[...] = y.astype(o_ref.dtype)


def _round_up(a, b):
    return ((a + b - 1) // b) * b


def gelu_pallas(x, *, max_lane=1024):
    orig_shape = x.shape
    dtype = x.dtype
    total = int(x.size)
    if total == 0:
        return x

    itemsize = jnp.dtype(dtype).itemsize
    # Sublane quantum: 8 for 32-bit, 16 for 16-bit, 32 for 8-bit dtypes.
    sub = max(8, 32 // itemsize)
    # Keep the per-block byte size ~4 MiB regardless of dtype width
    # (double-buffered in+out => ~16 MiB resident, safe on v5e/v6e/v7x).
    max_block_rows = 1024 * (4 // itemsize)

    # Lane width: largest power-of-two multiple of 128 (<= max_lane) dividing
    # `total` -> no pad / no post-slice for common hidden sizes.
    lane = 128
    while lane < max_lane and total % (lane * 2) == 0:
        lane *= 2

    rows = pl.cdiv(total, lane)

    # Block rows: multiple of the sublane quantum (or == rows for tiny inputs),
    # capped at ~4 MiB, and split so the grid has >=2 blocks whenever possible
    # (lets v7x shard across both TensorCores via dimension_semantics).
    if rows <= sub:
        tm = rows
    else:
        tm = min(max_block_rows, _round_up(pl.cdiv(rows, 2), sub))
        tm = max(tm, sub)

    padded_total = rows * lane  # pad at most lane-1 elements (awkward totals only)
    x_flat = x.reshape(-1)
    if padded_total != total:
        x_flat = jnp.pad(x_flat, (0, padded_total - total))
    x2d = x_flat.reshape(rows, lane)

    grid = (pl.cdiv(rows, tm),)  # last block may be partial; Pallas masks OOB writes

    out = pl.pallas_call(
        _gelu_kernel,
        out_shape=jax.ShapeDtypeStruct((rows, lane), dtype),
        grid_spec=pltpu.PrefetchScalarGridSpec(
            num_scalar_prefetch=0,
            grid=grid,
            in_specs=[pl.BlockSpec((tm, lane), lambda i: (i, 0))],
            out_specs=pl.BlockSpec((tm, lane), lambda i: (i, 0)),
        ),
        compiler_params=pltpu.CompilerParams(
            dimension_semantics=("parallel",),
            vmem_limit_bytes=32 * 1024 * 1024,
        ),
    )(x2d)

    out_flat = out.reshape(-1)
    if padded_total != total:
        out_flat = out_flat[:total]
    return out_flat.reshape(orig_shape)


def gelu_ref(x):
    return 0.5 * x * (1.0 + jnp.tanh(jnp.sqrt(2.0 / jnp.pi) * (x + 0.044715 * x ** 3)))


if __name__ == "__main__":
    key = jax.random.PRNGKey(0)

    # Shape implied by the module's usage: activations [batch, seq, hidden].
    x = jax.random.normal(key, (2, 8, 32), dtype=jnp.float32)
    y = jax.block_until_ready(gelu_pallas(x))
    assert y.shape == x.shape and y.dtype == x.dtype
    assert jnp.allclose(y, gelu_ref(x), atol=1e-5, rtol=1e-5)

    # Awkward shape: exercises the lane=128 + tiny-pad + partial-last-block path.
    x2 = jax.random.normal(jax.random.PRNGKey(0), (3, 5, 129), dtype=jnp.float32)
    y2 = jax.block_until_ready(gelu_pallas(x2))
    assert y2.shape == x2.shape and y2.dtype == x2.dtype
    assert jnp.allclose(y2, gelu_ref(x2), atol=1e-5, rtol=1e-5)

    # Divisible "real" shape: no pad, no post-slice, multi-block grid.
    x3 = jax.random.normal(jax.random.PRNGKey(1), (4, 16, 256), dtype=jnp.bfloat16)
    y3 = jax.block_until_ready(gelu_pallas(x3))
    assert y3.shape == x3.shape and y3.dtype == x3.dtype
    assert jnp.allclose(y3.astype(jnp.float32), gelu_ref(x3.astype(jnp.float32)),
                        atol=2e-2, rtol=2e-2)

    print("KERNEL_OK")
</pallas_src>

<mosaic_0001>
module attributes {stable_mosaic.version = 11 : i64} {
  func.func @_gelu_kernel(%arg0: i32, %arg1: memref<1x512xf32, #tpu.memory_space<vmem>>, %arg2: memref<1x512xf32, #tpu.memory_space<vmem>>) attributes {dimension_semantics = [#tpu.dimension_semantics<parallel>], iteration_bounds = array<i64: 1>, scalar_prefetch = 0 : i64, scratch_operands = 0 : i64, tpu.core_type = #tpu.core_type<tc>, window_params = [{transform_indices = @transform_0, window_bounds = array<i64: 1, 512>}, {transform_indices = @transform_1, window_bounds = array<i64: 1, 512>}]} {
    %c0 = arith.constant 0 : index
    %c0_0 = arith.constant 0 : index
    %0 = vector.load %arg1[%c0, %c0_0] : memref<1x512xf32, #tpu.memory_space<vmem>>, vector<1x512xf32>
    %cst = arith.constant 1.59576917 : f32
    %1 = vector.broadcast %cst : f32 to vector<1x512xf32>
    %2 = arith.mulf %1, %0 : vector<1x512xf32>
    %3 = arith.mulf %0, %0 : vector<1x512xf32>
    %cst_1 = arith.constant 4.471500e-02 : f32
    %4 = vector.broadcast %cst_1 : f32 to vector<1x512xf32>
    %5 = arith.mulf %4, %3 : vector<1x512xf32>
    %cst_2 = arith.constant 1.000000e+00 : f32
    %6 = vector.broadcast %cst_2 : f32 to vector<1x512xf32>
    %7 = arith.addf %6, %5 : vector<1x512xf32>
    %8 = arith.mulf %2, %7 : vector<1x512xf32>
    %9 = arith.negf %8 : vector<1x512xf32>
    %10 = math.exp %9 : vector<1x512xf32>
    %cst_3 = arith.constant 1.000000e+00 : f32
    %11 = vector.broadcast %cst_3 : f32 to vector<1x512xf32>
    %12 = arith.addf %11, %10 : vector<1x512xf32>
    %13 = arith.divf %11, %12 : vector<1x512xf32>
    %14 = arith.mulf %0, %13 : vector<1x512xf32>
    %c0_4 = arith.constant 0 : index
    %c0_5 = arith.constant 0 : index
    %15 = vector.load %arg2[%c0_4, %c0_5] : memref<1x512xf32, #tpu.memory_space<vmem>>, vector<1x512xf32>
    tpu.vector_store %arg2[%c0_4, %c0_5], %14 {strides = array<i32>} : memref<1x512xf32, #tpu.memory_space<vmem>>, vector<1x512xf32>,
    return
  }
  func.func @transform_0(%arg0: i32) -> (i32, i32) {
    %c0_i32 = arith.constant 0 : i32
    %c0_i32_0 = arith.constant 0 : i32
    return %arg0, %c0_i32 : i32, i32
  }
  func.func @transform_1(%arg0: i32) -> (i32, i32) {
    %c0_i32 = arith.constant 0 : i32
    %c0_i32_0 = arith.constant 0 : i32
    return %arg0, %c0_i32 : i32, i32
  }
}

</mosaic_0001>

<llo_original>
// kernel: tpu_custom_call.1
$region0: #{tpu_custom_call.1}
  #allocation0 [shape = 'u32[]', space=smem, size = 0x4, offset = 0x4, fixed_abs, tag = 'smem constant byte address 0x4 - core index']
  #allocation1 [shape = 'u32[144,128]{1,0:T(1,128)}', space=vmem, size = 0x12000, scoped, tag = 'internal scratch']
  %s0 = inlined_call_operand.hbm [shape: f32[1,512], index: 0, kind: input, shape index: {}]
  %s1 = inlined_call_operand.hbm [shape: f32[1,512], index: 1, kind: output, shape index: {}]
  %s2 = sld [smem:[#allocation0]]
  $region18: #{tpu_custom_call.1} parent=0
    _
  %s4 = ssub.s32 1, %s2
  %s5 = scalar_select 0, %s4, %s2
  $region1: #{tpu_custom_call.1} parent=0
    #allocation2 [shape = 'u8[2048]{0}', space=vmem, size = 0x800, scoped, tag = 'input window, operand 0, single buffered']
    #allocation3 [shape = 's32[1]{0}', space=sflag, size = 0x4, scoped, tag = 'scoped memory for tpu_custom_call.1']
    #allocation4 [shape = 's32[1]{0}', space=sflag, size = 0x4, scoped, tag = 'scoped memory for tpu_custom_call.1']
    #allocation5 [shape = 'u8[2048]{0}', space=vmem, size = 0x800, scoped, tag = 'output window, operand 0, single buffered']
    %6 = vsyncpa [#allocation3], 0
    %7 = vsyncpa [#allocation4], 0
    // Predicated region
    $region2: #{tpu_custom_call.1} parent=1 // pred_check
      _
    $region3: #{tpu_custom_call.1} parent=1 // pred_check_branch
      %9 = sbr.rel (0) target = $region5
    $region4: #{tpu_custom_call.1} parent=1 // pred_region
      %s11 = ssub.s32 64, 64
      %12 = vsyncadd [#allocation3], %s11
      %s14 = sshll.u32 [#allocation2], 4
      %s15 = int_to_ptr.vmem [resolvable:$true] %s14
      %17 = dma.hbm_to_vmem [thread:$0]  %s0, 64, %s15, [#allocation3]
    $region5: #{tpu_custom_call.1} parent=1 // pred_fallthru
      _
    // Predicated region
    $region6: #{tpu_custom_call.1} parent=1 // pred_check
      _
    $region7: #{tpu_custom_call.1} parent=1 // pred_check_branch
      %19 = sbr.rel (0) target = $region9
    $region8: #{tpu_custom_call.1} parent=1 // pred_region
      %20 = dma.done [#allocation3], 64
    $region9: #{tpu_custom_call.1} parent=1 // pred_fallthru
      _
    %v21 = vld [vmem:[#allocation2] sm:$0xf]
    %v22 = vmul.f32 %v21, 1.5957692
    %v23 = vmul.f32 %v21, %v21
    %v24 = vmul.f32 %v23, 0.044715
    %v25 = vadd.f32 %v24, 1.0
    %v26 = vmul.f32 %v22, %v25
    %v27 = vxor.u32 %v26, 2147483648
    %v28 = vmul.f32 %v27, 1.442695
    %v29 = vpow.pop %v28
    %v30 = vadd.f32 %v29, 1.0
    %v31 = vrcp.pop %v30
    %v32 = vmul.f32 1.0, %v31
    %v33 = vmul.f32 %v21, %v32
    %v34 = vlaneseq
    %vm35 = vcmp.ge.s32.totalorder %v34, 0
    %vm36 = vcmp.lt.s32.totalorder %v34, 512
    %vm37 = vmand %vm35, %vm36
    %38 = vst.msk [vmem:[#allocation5] sm:$0xf] %vm37, %v33
    // Predicated region
    $region10: #{tpu_custom_call.1} parent=1 // pred_check
      _
    $region11: #{tpu_custom_call.1} parent=1 // pred_check_branch
      %40 = sbr.rel (0) target = $region13
    $region12: #{tpu_custom_call.1} parent=1 // pred_region
      %s42 = ssub.s32 64, 64
      %43 = vsyncadd [#allocation4], %s42
      %s45 = sshll.u32 [#allocation5], 4
      %s46 = int_to_ptr.vmem [resolvable:$true] %s45
      %48 = dma.vmem_to_hbm [thread:$0]  %s46, 64, %s1, [#allocation4]
    $region13: #{tpu_custom_call.1} parent=1 // pred_fallthru
      _
    // Predicated region
    $region14: #{tpu_custom_call.1} parent=1 // pred_check
      _
    $region15: #{tpu_custom_call.1} parent=1 // pred_check_branch
      %50 = sbr.rel (0) target = $region17
    $region16: #{tpu_custom_call.1} parent=1 // pred_region
      %51 = dma.done [#allocation4], 64
    $region17: #{tpu_custom_call.1} parent=1 // pred_fallthru
      _
    %52 = vsyncpa [#allocation3], 1
    %53 = vsyncpa [#allocation4], 1

</llo_original>
